<compile_context>
chip_gen: v7x
topology: tpu7x:2x2x1
jax: 0.10.0
libtpu: 0.0.40
codegen_flags: <defaults>
</compile_context>

<pallas_src>
import jax
import jax.numpy as jnp
from jax.experimental import pallas as pl
from jax.experimental.pallas import tpu as pltpu


def _round_up(x, m):
    return (x + m - 1) // m * m


def _make_fused_mlp_kernel(hidden_count, hidden_size):
    """Kernel refs: (x, w1, b1, ..., wL, bL, w_out, b_out, out)."""

    def kernel(*refs):
        x_ref = refs[0]
        out_ref = refs[-1]
        layer_refs = refs[1:-1]                      # 2 * (hidden_count + 1) refs

        x = x_ref[...].astype(jnp.float32)           # (TN, D_pad), f32 activation

        # Hidden layers: Linear -> LogSoftmax over the (padded) feature dim.
        for li in range(hidden_count):
            w_ref = layer_refs[2 * li]               # (K_pad, H_pad) bf16
            b_ref = layer_refs[2 * li + 1]           # (1,   H_pad) f32
            h = jnp.dot(x.astype(jnp.bfloat16), w_ref[...],
                        preferred_element_type=jnp.float32)
            h = h + b_ref[...].astype(jnp.float32)

            h_pad = h.shape[-1]
            col = jax.lax.broadcasted_iota(jnp.int32, (1, h_pad), 1)
            valid = col < hidden_size                # static mask for real columns
            m = jnp.max(jnp.where(valid, h, -jnp.inf), axis=-1, keepdims=True)
            s = jnp.where(valid, jnp.exp(h - m), 0.0)
            lse = jnp.log(jnp.sum(s, axis=-1, keepdims=True))
            # Padded columns of x get finite garbage (h=0 there), but the
            # matching weight rows of the next layer are zero, so it cancels.
            x = h - m - lse

        wo_ref = layer_refs[-2]                      # (H_pad, C_pad) bf16
        bo_ref = layer_refs[-1]                      # (1,    C_pad) f32
        y = jnp.dot(x.astype(jnp.bfloat16), wo_ref[...],
                    preferred_element_type=jnp.float32)
        y = y + bo_ref[...].astype(jnp.float32)
        out_ref[...] = y.astype(out_ref.dtype)

    return kernel


def mlp_forward(x, params):
    """params: list of (W_T, b) with W_T shaped (in, out); last pair is the output layer."""
    n = x.shape[0]
    x2 = x.reshape(n, -1).astype(jnp.float32)        # x.view(N, -1)
    d = x2.shape[1]

    *hidden, (wo_t, bo) = params
    hidden_count = len(hidden)
    hidden_size = hidden[0][0].shape[1] if hidden else d
    num_classes = wo_t.shape[1]

    # Lane/sublane-dense padded shapes.
    batch_tile = min(256, _round_up(max(n, 1), 8))
    n_pad = _round_up(n, batch_tile)
    d_pad = _round_up(d, 128)
    h_pad = _round_up(hidden_size, 128)
    c_pad = _round_up(num_classes, 128)

    x_p = jnp.zeros((n_pad, d_pad), jnp.float32).at[:n, :d].set(x2)

    padded = []
    in_dim_pad = d_pad
    for (w_t, b) in hidden:
        in_dim, out_dim = w_t.shape
        w_p = jnp.zeros((in_dim_pad, h_pad), jnp.bfloat16)
        w_p = w_p.at[:in_dim, :out_dim].set(w_t.astype(jnp.bfloat16))
        b_p = jnp.zeros((1, h_pad), jnp.float32).at[0, :out_dim].set(b.astype(jnp.float32))
        padded += [w_p, b_p]
        in_dim_pad = h_pad
    in_dim, out_dim = wo_t.shape
    wo_p = jnp.zeros((in_dim_pad, c_pad), jnp.bfloat16)
    wo_p = wo_p.at[:in_dim, :out_dim].set(wo_t.astype(jnp.bfloat16))
    bo_p = jnp.zeros((1, c_pad), jnp.float32).at[0, :out_dim].set(bo.astype(jnp.float32))
    padded += [wo_p, bo_p]

    kernel = _make_fused_mlp_kernel(hidden_count, hidden_size)

    grid = (n_pad // batch_tile,)
    in_specs = [pl.BlockSpec((batch_tile, d_pad), lambda i: (i, 0))]
    for arr in padded:                               # weights/biases resident across the grid
        in_specs.append(pl.BlockSpec(arr.shape, lambda i: (0, 0)))
    out_specs = pl.BlockSpec((batch_tile, c_pad), lambda i: (i, 0))

    # Advisory cost estimate for the XLA scheduler.
    k_dims = [d_pad] + [h_pad] * hidden_count
    m_dims = [h_pad] * hidden_count + [c_pad]
    flops = sum(2 * n_pad * k * m for k, m in zip(k_dims, m_dims))
    transcendentals = n_pad * h_pad * hidden_count
    bytes_accessed = (x_p.size * 4 + n_pad * c_pad * 4
                      + sum(a.size * a.dtype.itemsize for a in padded))

    out_p = pl.pallas_call(
        kernel,
        out_shape=jax.ShapeDtypeStruct((n_pad, c_pad), jnp.float32),
        grid=grid,
        in_specs=in_specs,
        out_specs=out_specs,
        compiler_params=pltpu.CompilerParams(
            dimension_semantics=("parallel",),
            vmem_limit_bytes=32 * 1024 * 1024),
        cost_estimate=pl.CostEstimate(
            flops=flops, transcendentals=transcendentals,
            bytes_accessed=bytes_accessed),
    )(x_p, *padded)

    return out_p[:n, :num_classes]


def init_params(key, input_size, hidden_size, num_classes, hidden_count=1):
    """Deterministic init mirroring the PyTorch module's __init__."""
    params = []
    fan_in = input_size
    for i in range(hidden_count):
        key, kw, kb = jax.random.split(key, 3)
        bound = 1.0 / jnp.sqrt(fan_in)
        if i == 0:
            # self.layers[0].weight = torch.nn.init.ones_(...)
            w = jnp.ones((hidden_size, fan_in), jnp.float32)
        else:
            w = jax.random.uniform(kw, (hidden_size, fan_in), jnp.float32,
                                   minval=-bound, maxval=bound)
        b = jax.random.uniform(kb, (hidden_size,), jnp.float32,
                               minval=-bound, maxval=bound)
        params.append((w.T, b))                       # store transposed (in, out)
        fan_in = hidden_size
    key, kw, kb = jax.random.split(key, 3)
    bound = 1.0 / jnp.sqrt(fan_in)
    wo = jax.random.uniform(kw, (num_classes, fan_in), jnp.float32,
                            minval=-bound, maxval=bound)
    bo = jax.random.uniform(kb, (num_classes,), jnp.float32,
                            minval=-bound, maxval=bound)
    params.append((wo.T, bo))
    return params


def _reference(x, params):
    """Pure-JAX reference mirroring the kernel math (bf16 MXU inputs, f32 accumulation)."""
    n = x.shape[0]
    xr = x.reshape(n, -1).astype(jnp.float32)
    *hidden, (wo_t, bo) = params
    for (w_t, b) in hidden:
        h = jnp.dot(xr.astype(jnp.bfloat16), w_t.astype(jnp.bfloat16),
                    preferred_element_type=jnp.float32) + b.astype(jnp.float32)
        xr = jax.nn.log_softmax(h, axis=-1)
    return jnp.dot(xr.astype(jnp.bfloat16), wo_t.astype(jnp.bfloat16),
                   preferred_element_type=jnp.float32) + bo.astype(jnp.float32)


if __name__ == "__main__":
    batch, channels, spatial = 2, 4, 16               # input x: (2, 4, 16)
    input_size = channels * spatial                   # D = 64 after flatten
    hidden_size = 32                                  # H
    num_classes = 10                                  # C
    hidden_count = 1

    key = jax.random.PRNGKey(0)
    key, kx = jax.random.split(key)
    x = jax.random.normal(kx, (batch, channels, spatial), jnp.float32)

    params = init_params(key, input_size, hidden_size, num_classes, hidden_count)

    out = mlp_forward(x, params)
    out = jax.block_until_ready(out)

    ref = _reference(x, params)
    assert out.shape == (batch, num_classes), out.shape
    assert bool(jnp.allclose(out, ref, atol=1e-5, rtol=1e-5)), (
        float(jnp.max(jnp.abs(out - ref))))

    print("KERNEL_OK")
</pallas_src>

<mosaic_0001>
module attributes {stable_mosaic.version = 11 : i64} {
  func.func @kernel(%arg0: i32, %arg1: memref<8x128xf32, #tpu.memory_space<vmem>>, %arg2: memref<128x128xbf16, #tpu.memory_space<vmem>>, %arg3: memref<1x128xf32, #tpu.memory_space<vmem>>, %arg4: memref<128x128xbf16, #tpu.memory_space<vmem>>, %arg5: memref<1x128xf32, #tpu.memory_space<vmem>>, %arg6: memref<8x128xf32, #tpu.memory_space<vmem>>) attributes {dimension_semantics = [#tpu.dimension_semantics<parallel>], iteration_bounds = array<i64: 1>, scalar_prefetch = 0 : i64, scratch_operands = 0 : i64, tpu.core_type = #tpu.core_type<tc>, window_params = [{transform_indices = @transform_0, window_bounds = array<i64: 8, 128>}, {pipeline_mode = #tpu.pipeline_mode<synchronous>, transform_indices = @transform_1, window_bounds = array<i64: 128, 128>}, {pipeline_mode = #tpu.pipeline_mode<synchronous>, transform_indices = @transform_2, window_bounds = array<i64: 1, 128>}, {pipeline_mode = #tpu.pipeline_mode<synchronous>, transform_indices = @transform_3, window_bounds = array<i64: 128, 128>}, {pipeline_mode = #tpu.pipeline_mode<synchronous>, transform_indices = @transform_4, window_bounds = array<i64: 1, 128>}, {transform_indices = @transform_5, window_bounds = array<i64: 8, 128>}]} {
    %c0 = arith.constant 0 : index
    %c0_0 = arith.constant 0 : index
    %0 = vector.load %arg1[%c0, %c0_0] : memref<8x128xf32, #tpu.memory_space<vmem>>, vector<8x128xf32>
    %1 = arith.truncf %0 : vector<8x128xf32> to vector<8x128xbf16>
    %c0_1 = arith.constant 0 : index
    %c0_2 = arith.constant 0 : index
    %2 = vector.load %arg2[%c0_1, %c0_2] : memref<128x128xbf16, #tpu.memory_space<vmem>>, vector<128x128xbf16>
    %cst = arith.constant dense<0.000000e+00> : vector<8x128xf32>
    %3 = tpu.matmul %1, %2, %cst {dimension_numbers = #tpu.dot_dimension_numbers<[1], [0], [0], [1], [0, 0, 1, 1], [], []>} : vector<8x128xbf16>, vector<128x128xbf16>, vector<8x128xf32> -> vector<8x128xf32>
    %c0_3 = arith.constant 0 : index
    %c0_4 = arith.constant 0 : index
    %4 = vector.load %arg3[%c0_3, %c0_4] : memref<1x128xf32, #tpu.memory_space<vmem>>, vector<1x128xf32>
    %5 = vector.broadcast %4 : vector<1x128xf32> to vector<8x128xf32>
    %6 = arith.addf %3, %5 : vector<8x128xf32>
    %7 = tpu.iota {dimensions = array<i32: 1>} : vector<1x128xi32>
    %c32_i32 = arith.constant 32 : i32
    %8 = vector.broadcast %c32_i32 : i32 to vector<1x128xi32>
    %9 = arith.cmpi slt, %7, %8 : vector<1x128xi32>
    %cst_5 = arith.constant 0xFF800000 : f32
    %10 = vector.shape_cast %9 : vector<1x128xi1> to vector<1x128xi1>
    %11 = vector.broadcast %10 : vector<1x128xi1> to vector<8x128xi1>
    %12 = vector.broadcast %cst_5 : f32 to vector<8x128xf32>
    %13 = arith.select %11, %6, %12 : vector<8x128xi1>, vector<8x128xf32>
    %cst_6 = arith.constant dense<0xFF800000> : vector<8xf32>
    %14 = vector.multi_reduction <maximumf>, %13, %cst_6 [1] : vector<8x128xf32> to vector<8xf32>
    %15 = vector.shape_cast %14 : vector<8xf32> to vector<8x1xf32>
    %16 = vector.broadcast %15 : vector<8x1xf32> to vector<8x128xf32>
    %17 = arith.subf %6, %16 : vector<8x128xf32>
    %18 = math.exp %17 : vector<8x128xf32>
    %cst_7 = arith.constant 0.000000e+00 : f32
    %19 = vector.shape_cast %9 : vector<1x128xi1> to vector<1x128xi1>
    %20 = vector.broadcast %19 : vector<1x128xi1> to vector<8x128xi1>
    %21 = vector.broadcast %cst_7 : f32 to vector<8x128xf32>
    %22 = arith.select %20, %18, %21 : vector<8x128xi1>, vector<8x128xf32>
    %cst_8 = arith.constant dense<0.000000e+00> : vector<8xf32>
    %23 = vector.multi_reduction <add>, %22, %cst_8 [1] : vector<8x128xf32> to vector<8xf32>
    %24 = vector.shape_cast %23 : vector<8xf32> to vector<8x1xf32>
    %25 = math.log %24 : vector<8x1xf32>
    %26 = vector.broadcast %15 : vector<8x1xf32> to vector<8x128xf32>
    %27 = arith.subf %6, %26 : vector<8x128xf32>
    %28 = vector.broadcast %25 : vector<8x1xf32> to vector<8x128xf32>
    %29 = arith.subf %27, %28 : vector<8x128xf32>
    %30 = arith.truncf %29 : vector<8x128xf32> to vector<8x128xbf16>
    %c0_9 = arith.constant 0 : index
    %c0_10 = arith.constant 0 : index
    %31 = vector.load %arg4[%c0_9, %c0_10] : memref<128x128xbf16, #tpu.memory_space<vmem>>, vector<128x128xbf16>
    %cst_11 = arith.constant dense<0.000000e+00> : vector<8x128xf32>
    %32 = tpu.matmul %30, %31, %cst_11 {dimension_numbers = #tpu.dot_dimension_numbers<[1], [0], [0], [1], [0, 0, 1, 1], [], []>} : vector<8x128xbf16>, vector<128x128xbf16>, vector<8x128xf32> -> vector<8x128xf32>
    %c0_12 = arith.constant 0 : index
    %c0_13 = arith.constant 0 : index
    %33 = vector.load %arg5[%c0_12, %c0_13] : memref<1x128xf32, #tpu.memory_space<vmem>>, vector<1x128xf32>
    %34 = vector.broadcast %33 : vector<1x128xf32> to vector<8x128xf32>
    %35 = arith.addf %32, %34 : vector<8x128xf32>
    %c0_14 = arith.constant 0 : index
    %c0_15 = arith.constant 0 : index
    %36 = vector.load %arg6[%c0_14, %c0_15] : memref<8x128xf32, #tpu.memory_space<vmem>>, vector<8x128xf32>
    tpu.vector_store %arg6[%c0_14, %c0_15], %35 {strides = array<i32>} : memref<8x128xf32, #tpu.memory_space<vmem>>, vector<8x128xf32>,
    return
  }
  func.func @transform_0(%arg0: i32) -> (i32, i32) {
    %c0_i32 = arith.constant 0 : i32
    %c0_i32_0 = arith.constant 0 : i32
    return %arg0, %c0_i32 : i32, i32
  }
  func.func @transform_1(%arg0: i32) -> (i32, i32) {
    %c0_i32 = arith.constant 0 : i32
    %c0_i32_0 = arith.constant 0 : i32
    %c0_i32_1 = arith.constant 0 : i32
    return %c0_i32, %c0_i32_0 : i32, i32
  }
  func.func @transform_2(%arg0: i32) -> (i32, i32) {
    %c0_i32 = arith.constant 0 : i32
    %c0_i32_0 = arith.constant 0 : i32
    %c0_i32_1 = arith.constant 0 : i32
    return %c0_i32, %c0_i32_0 : i32, i32
  }
  func.func @transform_3(%arg0: i32) -> (i32, i32) {
    %c0_i32 = arith.constant 0 : i32
    %c0_i32_0 = arith.constant 0 : i32
    %c0_i32_1 = arith.constant 0 : i32
    return %c0_i32, %c0_i32_0 : i32, i32
  }
  func.func @transform_4(%arg0: i32) -> (i32, i32) {
    %c0_i32 = arith.constant 0 : i32
    %c0_i32_0 = arith.constant 0 : i32
    %c0_i32_1 = arith.constant 0 : i32
    return %c0_i32, %c0_i32_0 : i32, i32
  }
  func.func @transform_5(%arg0: i32) -> (i32, i32) {
    %c0_i32 = arith.constant 0 : i32
    %c0_i32_0 = arith.constant 0 : i32
    return %arg0, %c0_i32 : i32, i32
  }
}

</mosaic_0001>

<llo_original>
// kernel: tpu_custom_call.1
$region0: #{tpu_custom_call.1}
  #allocation0 [shape = 'u32[]', space=smem, size = 0x4, offset = 0x4, fixed_abs, tag = 'smem constant byte address 0x4 - core index']
  #allocation1 [shape = 'u32[144,128]{1,0:T(1,128)}', space=vmem, size = 0x12000, scoped, tag = 'internal scratch']
  %s0 = inlined_call_operand.hbm [shape: f32[8,128], index: 0, kind: input, shape index: {}]
  %s1 = inlined_call_operand.hbm [shape: bf16[128,128], index: 1, kind: input, shape index: {}]
  %s2 = inlined_call_operand.vmem [shape: f32[1,128], index: 2, kind: input, shape index: {}]
  %s3 = inlined_call_operand.hbm [shape: bf16[128,128], index: 3, kind: input, shape index: {}]
  %s4 = inlined_call_operand.vmem [shape: f32[1,128], index: 4, kind: input, shape index: {}]
  %s5 = inlined_call_operand.hbm [shape: f32[8,128], index: 5, kind: output, shape index: {}]
  %s6 = sld [smem:[#allocation0]]
  $region42: #{tpu_custom_call.1} parent=0
    _
  %s8 = ssub.s32 1, %s6
  %s9 = scalar_select 0, %s8, %s6
  $region1: #{tpu_custom_call.1} parent=0
    #allocation2 [shape = 'u8[4096]{0}', space=vmem, size = 0x1000, scoped, tag = 'input window, operand 0, single buffered']
    #allocation3 [shape = 's32[1]{0}', space=sflag, size = 0x4, scoped, tag = 'scoped memory for tpu_custom_call.1']
    #allocation4 [shape = 's32[1]{0}', space=sflag, size = 0x4, scoped, tag = 'scoped memory for tpu_custom_call.1']
    #allocation5 [shape = 'u8[32768]{0}', space=vmem, size = 0x8000, scoped, tag = 'input window, operand 1, single buffered']
    #allocation6 [shape = 's32[1]{0}', space=sflag, size = 0x4, scoped, tag = 'scoped memory for tpu_custom_call.1']
    #allocation7 [shape = 'u8[32768]{0}', space=vmem, size = 0x8000, scoped, tag = 'input window, operand 3, single buffered']
    #allocation8 [shape = 'u8[4096]{0}', space=vmem, size = 0x1000, scoped, tag = 'output window, operand 0, single buffered']
    %10 = vsyncpa [#allocation3], 0
    %11 = vsyncpa [#allocation6], 0
    %12 = vsyncpa [#allocation4], 0
    // Predicated region
    $region2: #{tpu_custom_call.1} parent=1 // pred_check
      _
    $region3: #{tpu_custom_call.1} parent=1 // pred_check_branch
      %14 = sbr.rel (0) target = $region5
    $region4: #{tpu_custom_call.1} parent=1 // pred_region
      %s16 = ssub.s32 128, 128
      %17 = vsyncadd [#allocation3], %s16
      %s19 = sshll.u32 [#allocation2], 4
      %s20 = int_to_ptr.vmem [resolvable:$true] %s19
      %22 = dma.hbm_to_vmem [thread:$0]  %s0, 128, %s20, [#allocation3]
    $region5: #{tpu_custom_call.1} parent=1 // pred_fallthru
      _
    // Predicated region
    $region6: #{tpu_custom_call.1} parent=1 // pred_check
      _
    $region7: #{tpu_custom_call.1} parent=1 // pred_check_branch
      %24 = sbr.rel (0) target = $region9
    $region8: #{tpu_custom_call.1} parent=1 // pred_region
      %s26 = ssub.s32 1024, 1024
      %27 = vsyncadd [#allocation6], %s26
      %s28 = sshll.u32 [#allocation5], 4
      %s29 = int_to_ptr.vmem [resolvable:$true] %s28
      %34 = dma.hbm_to_vmem [thread:$0]  %s1, 1024, %s29, [#allocation6], 64, 64, 4
    $region9: #{tpu_custom_call.1} parent=1 // pred_fallthru
      _
    // Predicated region
    $region10: #{tpu_custom_call.1} parent=1 // pred_check
      _
    $region11: #{tpu_custom_call.1} parent=1 // pred_check_branch
      %36 = sbr.rel (0) target = $region13
    $region12: #{tpu_custom_call.1} parent=1 // pred_region
      _
    $region13: #{tpu_custom_call.1} parent=1 // pred_fallthru
      _
    // Predicated region
    $region14: #{tpu_custom_call.1} parent=1 // pred_check
      _
    $region15: #{tpu_custom_call.1} parent=1 // pred_check_branch
      %38 = sbr.rel (0) target = $region17
    $region16: #{tpu_custom_call.1} parent=1 // pred_region
      %s40 = ssub.s32 1024, 1024
      %41 = vsyncadd [#allocation6], %s40
      %s42 = sshll.u32 [#allocation7], 4
      %s43 = int_to_ptr.vmem [resolvable:$true] %s42
      %48 = dma.hbm_to_vmem [thread:$0]  %s3, 1024, %s43, [#allocation6], 64, 64, 4
    $region17: #{tpu_custom_call.1} parent=1 // pred_fallthru
      _
    // Predicated region
    $region18: #{tpu_custom_call.1} parent=1 // pred_check
      _
    $region19: #{tpu_custom_call.1} parent=1 // pred_check_branch
      %50 = sbr.rel (0) target = $region21
    $region20: #{tpu_custom_call.1} parent=1 // pred_region
      _
    $region21: #{tpu_custom_call.1} parent=1 // pred_fallthru
      _
    // Predicated region
    $region22: #{tpu_custom_call.1} parent=1 // pred_check
      _
    $region23: #{tpu_custom_call.1} parent=1 // pred_check_branch
      %52 = sbr.rel (0) target = $region25
    $region24: #{tpu_custom_call.1} parent=1 // pred_region
      %53 = dma.done [#allocation3], 128
    $region25: #{tpu_custom_call.1} parent=1 // pred_fallthru
      _
    // Predicated region
    $region26: #{tpu_custom_call.1} parent=1 // pred_check
      _
    $region27: #{tpu_custom_call.1} parent=1 // pred_check_branch
      %55 = sbr.rel (0) target = $region29
    $region28: #{tpu_custom_call.1} parent=1 // pred_region
      %56 = dma.done [#allocation6], 1024
    $region29: #{tpu_custom_call.1} parent=1 // pred_fallthru
      _
    // Predicated region
    $region30: #{tpu_custom_call.1} parent=1 // pred_check
      _
    $region31: #{tpu_custom_call.1} parent=1 // pred_check_branch
      %58 = sbr.rel (0) target = $region33
    $region32: #{tpu_custom_call.1} parent=1 // pred_region
      %59 = dma.done [#allocation6], 1024
    $region33: #{tpu_custom_call.1} parent=1 // pred_fallthru
      _
    %v61 = vld [vmem:[#allocation2] sm:$0xff]
    %v62 = vpack.c.bf16 %v61, %v61
    %v63 = vld [vmem:[#allocation5] sm:$0xf]
    %v64 = vld [vmem:[#allocation5 + $0x4] sm:$0xf]
    %v65 = vld [vmem:[#allocation5 + $0x8] sm:$0xf]
    %v66 = vld [vmem:[#allocation5 + $0xc] sm:$0xf]
    %v67 = vld [vmem:[#allocation5 + $0x10] sm:$0xf]
    %v68 = vld [vmem:[#allocation5 + $0x14] sm:$0xf]
    %v69 = vld [vmem:[#allocation5 + $0x18] sm:$0xf]
    %v70 = vld [vmem:[#allocation5 + $0x1c] sm:$0xf]
    %v71 = vld [vmem:[#allocation5 + $0x20] sm:$0xf]
    %v72 = vld [vmem:[#allocation5 + $0x24] sm:$0xf]
    %v73 = vld [vmem:[#allocation5 + $0x28] sm:$0xf]
    %v74 = vld [vmem:[#allocation5 + $0x2c] sm:$0xf]
    %v75 = vld [vmem:[#allocation5 + $0x30] sm:$0xf]
    %v76 = vld [vmem:[#allocation5 + $0x34] sm:$0xf]
    %v77 = vld [vmem:[#allocation5 + $0x38] sm:$0xf]
    %v78 = vld [vmem:[#allocation5 + $0x3c] sm:$0xf]
    %v79 = vld [vmem:[%s2] sm:$0x1]
    %v81 = vlaneseq
    %v82 = vshrl.u32 %v81, 7
    %v83 = vsub.s32 0, %v82
    %v84 = vrot.slane %v79, %v83
    %v102 = vunpack.c.l.b16 %v63
    %v103 = vunpack.c.l.b16 %v64
    %v104 = vunpack.c.l.b16 %v65
    %v105 = vunpack.c.l.b16 %v66
    %v106 = vunpack.c.l.b16 %v67
    %v107 = vunpack.c.l.b16 %v68
    %v108 = vunpack.c.l.b16 %v69
    %v109 = vunpack.c.l.b16 %v70
    %v110 = vunpack.c.l.b16 %v71
    %v111 = vunpack.c.l.b16 %v72
    %v112 = vunpack.c.l.b16 %v73
    %v113 = vunpack.c.l.b16 %v74
    %v114 = vunpack.c.l.b16 %v75
    %v115 = vunpack.c.l.b16 %v76
    %v116 = vunpack.c.l.b16 %v77
    %v117 = vunpack.c.l.b16 %v78
    %v118 = vpack.c.b16 %v103, %v102
    %v119 = vpack.c.b16 %v105, %v104
    %v120 = vpack.c.b16 %v107, %v106
    %v121 = vpack.c.b16 %v109, %v108
    %v122 = vpack.c.b16 %v111, %v110
    %v123 = vpack.c.b16 %v113, %v112
    %v124 = vpack.c.b16 %v115, %v114
    %v125 = vpack.c.b16 %v117, %v116
    %134 = vmatprep.subr.bf16.mxu0 0
    %135 = vmatpush1.bf16.msra.mxu0 %v118
    %136 = vmatprep.subr.bf16.mxu0 0
    %137 = vmatpush1.bf16.msra.mxu0 %v119
    %138 = vmatprep.subr.bf16.mxu0 0
    %139 = vmatpush1.bf16.msra.mxu0 %v120
    %140 = vmatprep.subr.bf16.mxu0 0
    %141 = vmatpush1.bf16.msra.mxu0 %v121
    %142 = vmatprep.subr.bf16.mxu0 0
    %143 = vmatpush1.bf16.msra.mxu0 %v122
    %144 = vmatprep.subr.bf16.mxu0 0
    %145 = vmatpush1.bf16.msra.mxu0 %v123
    %146 = vmatprep.subr.bf16.mxu0 0
    %147 = vmatpush1.bf16.msra.mxu0 %v124
    %148 = vmatprep.subr.bf16.mxu0 0
    %149 = vmatpush1.bf16.msra.mxu0 %v125
    %150 = vmatprep.subr.bf16.mxu0 0
    %151 = vmatpush1.bf16.msra.mxu0 0
    %152 = vmatprep.subr.bf16.mxu0 0
    %153 = vmatpush1.bf16.msra.mxu0 0
    %154 = vmatprep.subr.bf16.mxu0 0
    %155 = vmatpush1.bf16.msra.mxu0 0
    %156 = vmatprep.subr.bf16.mxu0 0
    %157 = vmatpush1.bf16.msra.mxu0 0
    %158 = vmatprep.subr.bf16.mxu0 0
    %159 = vmatpush1.bf16.msra.mxu0 0
    %160 = vmatprep.subr.bf16.mxu0 0
    %161 = vmatpush1.bf16.msra.mxu0 0
    %162 = vmatprep.subr.bf16.mxu0 0
    %163 = vmatpush1.bf16.msra.mxu0 0
    %164 = vmatprep.subr.bf16.mxu0 0
    %165 = vmatpush1.bf16.msra.mxu0 0
    %166 = vmatprep.mubr.bf16.mxu0 0
    %167 = vmatmul.mubr.bf16.gmra.mrb[0].mxu0 %v62
    %v168 = vpop.f32.mrb[0].mxu0
    %v169 = vadd.f32 %v84, %v168
    %v170 = vpop.f32.mrb[0].mxu0
    %v171 = vpop.f32.mrb[0].mxu0
    %v172 = vpop.f32.mrb[0].mxu0
    %173 = vdwg.mxu0
    %v174 = vlaneseq
    %v175 = vand.u32 %v174, 127
    %vm176 = vcmp.lt.s32.totalorder %v175, 32
    %v177 = vsel %vm176, 1, 0
    %vm178 = vcmp.eq.s32.totalorder %v177, 1
    %v179 = vsel %vm178, %v169, -inf
    %180 = vmax.xlane.f32.xlu0 %v179
    %v181 = vpop.xlane.xlu0 %180
    %v182 = vsub.f32 %v169, %v181
    %v183 = vmul.f32 %v182, 1.442695
    %v184 = vpow.pop %v183
    %v185 = vsel %vm178, %v184, 0.0
    %186 = vadd.xlane.f32.xlu0 %v185
    %v187 = vpop.xlane.xlu0 %186
    %v188 = vlog2.pop %v187
    %v189 = vmul.f32 %v188, 0.6931472
    %v190 = vsub.f32 %v182, %v189
    %v191 = vpack.c.bf16 %v190, %v190
    %v192 = vld [vmem:[#allocation7] sm:$0xf]
    %v193 = vld [vmem:[#allocation7 + $0x4] sm:$0xf]
    %v194 = vld [vmem:[#allocation7 + $0x8] sm:$0xf]
    %v195 = vld [vmem:[#allocation7 + $0xc] sm:$0xf]
    %v196 = vld [vmem:[#allocation7 + $0x10] sm:$0xf]
    %v197 = vld [vmem:[#allocation7 + $0x14] sm:$0xf]
    %v198 = vld [vmem:[#allocation7 + $0x18] sm:$0xf]
    %v199 = vld [vmem:[#allocation7 + $0x1c] sm:$0xf]
    %v200 = vld [vmem:[#allocation7 + $0x20] sm:$0xf]
    %v201 = vld [vmem:[#allocation7 + $0x24] sm:$0xf]
    %v202 = vld [vmem:[#allocation7 + $0x28] sm:$0xf]
    %v203 = vld [vmem:[#allocation7 + $0x2c] sm:$0xf]
    %v204 = vld [vmem:[#allocation7 + $0x30] sm:$0xf]
    %v205 = vld [vmem:[#allocation7 + $0x34] sm:$0xf]
    %v206 = vld [vmem:[#allocation7 + $0x38] sm:$0xf]
    %v207 = vld [vmem:[#allocation7 + $0x3c] sm:$0xf]
    %v208 = vld [vmem:[%s4] sm:$0x1]
    %v210 = vlaneseq
    %v211 = vshrl.u32 %v210, 7
    %v212 = vsub.s32 0, %v211
    %v213 = vrot.slane %v208, %v212
    %v231 = vunpack.c.l.b16 %v192
    %v232 = vunpack.c.l.b16 %v193
    %v233 = vunpack.c.l.b16 %v194
    %v234 = vunpack.c.l.b16 %v195
    %v235 = vunpack.c.l.b16 %v196
    %v236 = vunpack.c.l.b16 %v197
    %v237 = vunpack.c.l.b16 %v198
    %v238 = vunpack.c.l.b16 %v199
    %v239 = vunpack.c.l.b16 %v200
    %v240 = vunpack.c.l.b16 %v201
    %v241 = vunpack.c.l.b16 %v202
    %v242 = vunpack.c.l.b16 %v203
    %v243 = vunpack.c.l.b16 %v204
    %v244 = vunpack.c.l.b16 %v205
    %v245 = vunpack.c.l.b16 %v206
    %v246 = vunpack.c.l.b16 %v207
    %v247 = vpack.c.b16 %v232, %v231
    %v248 = vpack.c.b16 %v234, %v233
    %v249 = vpack.c.b16 %v236, %v235
    %v250 = vpack.c.b16 %v238, %v237
    %v251 = vpack.c.b16 %v240, %v239
    %v252 = vpack.c.b16 %v242, %v241
    %v253 = vpack.c.b16 %v244, %v243
    %v254 = vpack.c.b16 %v246, %v245
    %263 = vmatprep.subr.bf16.mxu0 0
    %264 = vmatpush1.bf16.msra.mxu0 %v247
    %265 = vmatprep.subr.bf16.mxu0 0
    %266 = vmatpush1.bf16.msra.mxu0 %v248
    %267 = vmatprep.subr.bf16.mxu0 0
    %268 = vmatpush1.bf16.msra.mxu0 %v249
    %269 = vmatprep.subr.bf16.mxu0 0
    %270 = vmatpush1.bf16.msra.mxu0 %v250
    %271 = vmatprep.subr.bf16.mxu0 0
    %272 = vmatpush1.bf16.msra.mxu0 %v251
    %273 = vmatprep.subr.bf16.mxu0 0
    %274 = vmatpush1.bf16.msra.mxu0 %v252
    %275 = vmatprep.subr.bf16.mxu0 0
    %276 = vmatpush1.bf16.msra.mxu0 %v253
    %277 = vmatprep.subr.bf16.mxu0 0
    %278 = vmatpush1.bf16.msra.mxu0 %v254
    %279 = vmatprep.subr.bf16.mxu0 0
    %280 = vmatpush1.bf16.msra.mxu0 0
    %281 = vmatprep.subr.bf16.mxu0 0
    %282 = vmatpush1.bf16.msra.mxu0 0
    %283 = vmatprep.subr.bf16.mxu0 0
    %284 = vmatpush1.bf16.msra.mxu0 0
    %285 = vmatprep.subr.bf16.mxu0 0
    %286 = vmatpush1.bf16.msra.mxu0 0
    %287 = vmatprep.subr.bf16.mxu0 0
    %288 = vmatpush1.bf16.msra.mxu0 0
    %289 = vmatprep.subr.bf16.mxu0 0
    %290 = vmatpush1.bf16.msra.mxu0 0
    %291 = vmatprep.subr.bf16.mxu0 0
    %292 = vmatpush1.bf16.msra.mxu0 0
    %293 = vmatprep.subr.bf16.mxu0 0
    %294 = vmatpush1.bf16.msra.mxu0 0
    %295 = vmatprep.mubr.bf16.mxu0 0
    %296 = vmatmul.mubr.bf16.gmra.mrb[0].mxu0 %v191
    %v297 = vpop.f32.mrb[0].mxu0
    %v298 = vadd.f32 %v213, %v297
    %v299 = vpop.f32.mrb[0].mxu0
    %v300 = vpop.f32.mrb[0].mxu0
    %v301 = vpop.f32.mrb[0].mxu0
    %302 = vdwg.mxu0
    %303 = vst [vmem:[#allocation8] sm:$0xff] %v298
    // Predicated region
    $region34: #{tpu_custom_call.1} parent=1 // pred_check
      _
    $region35: #{tpu_custom_call.1} parent=1 // pred_check_branch
      %305 = sbr.rel (0) target = $region37
    $region36: #{tpu_custom_call.1} parent=1 // pred_region
      %s307 = ssub.s32 128, 128
      %308 = vsyncadd [#allocation4], %s307
      %s310 = sshll.u32 [#allocation8], 4
      %s311 = int_to_ptr.vmem [resolvable:$true] %s310
      %313 = dma.vmem_to_hbm [thread:$0]  %s311, 128, %s5, [#allocation4]
    $region37: #{tpu_custom_call.1} parent=1 // pred_fallthru
      _
    // Predicated region
    $region38: #{tpu_custom_call.1} parent=1 // pred_check
      _
    $region39: #{tpu_custom_call.1} parent=1 // pred_check_branch
      %315 = sbr.rel (0) target = $region41
    $region40: #{tpu_custom_call.1} parent=1 // pred_region
      %316 = dma.done [#allocation4], 128
    $region41: #{tpu_custom_call.1} parent=1 // pred_fallthru
      _
    %317 = vsyncpa [#allocation3], 1
    %318 = vsyncpa [#allocation6], 1
    %319 = vsyncpa [#allocation4], 1

</llo_original>
